<compile_context>
chip_gen: v6e
topology: v6e:2x2x1
jax: 0.10.0
libtpu: 0.0.40
codegen_flags: <defaults>
</compile_context>

<pallas_src>
import jax
import jax.numpy as jnp
from jax import lax
from jax.experimental import pallas as pl
from jax.experimental.pallas import tpu as pltpu

VPAD = 128  # padded vocab size of the concatenated embedding table


def _split_rows(n):
    """Pick (num_blocks, rows_per_block): 2 parallel blocks when possible."""
    if n >= 16 and n % 16 == 0:
        return 2, n // 2
    return 1, n  # full-extent block, always legal, never drops rows


def _multihot(idx_ref, n, vpad):
    """Build sum_k onehot(idx[:, k]) as an (n, vpad) f32 matrix (in-kernel)."""
    iota_v = lax.broadcasted_iota(jnp.int32, (n, vpad), 1)
    mh = jnp.zeros((n, vpad), jnp.float32)
    for kk in range(idx_ref.shape[1]):
        mh = mh + (idx_ref[:, kk:kk + 1] == iota_v).astype(jnp.float32)
    return mh


# ---------------------------------------------------------------------------
# Kernel 1: fused K-way embedding gather+sum for all discrete token streams.
#   out[n, :] = sum_k table[idx[n, k], :]        (index 0 == zero row)
# ---------------------------------------------------------------------------
def _multihot_embed_kernel(idx_ref, table_ref, o_ref):
    n = o_ref.shape[0]
    vpad = table_ref.shape[0]
    mh = _multihot(idx_ref, n, vpad)
    o_ref[...] = jnp.dot(mh, table_ref[...], preferred_element_type=jnp.float32)


def multihot_embed(idx, table):
    """idx: [N, K] int32 into `table`; table: [VPAD, C] f32. Returns [N, C]."""
    n, k = int(idx.shape[0]), int(idx.shape[1])
    vpad, c = int(table.shape[0]), int(table.shape[1])
    nblk, bn = _split_rows(n)
    return pl.pallas_call(
        _multihot_embed_kernel,
        out_shape=jax.ShapeDtypeStruct((n, c), table.dtype),
        grid=(nblk,),
        in_specs=[
            pl.BlockSpec((bn, k), lambda i: (i, 0)),
            pl.BlockSpec((vpad, c), lambda i: (0, 0)),   # table VMEM-resident
        ],
        out_specs=pl.BlockSpec((bn, c), lambda i: (i, 0)),
        compiler_params=pltpu.CompilerParams(dimension_semantics=("parallel",)),
    )(idx, table)


# ---------------------------------------------------------------------------
# Kernel 2: fused tile-token embedding.
#   out[n, :] = tiles[n, :] @ W + sum_k table[idx[n, k], :]
# (idx carries pos-embedding row, temporal row, and the bias row.)
# ---------------------------------------------------------------------------
def _tile_embed_kernel(idx_ref, x_ref, w_ref, table_ref, o_ref):
    n = o_ref.shape[0]
    vpad = table_ref.shape[0]
    mh = _multihot(idx_ref, n, vpad)
    add = jnp.dot(mh, table_ref[...], preferred_element_type=jnp.float32)
    o_ref[...] = (
        jnp.dot(x_ref[...], w_ref[...], preferred_element_type=jnp.float32) + add
    )


def tile_embed(tiles, w, idx, table):
    """tiles: [N, Dt] f32; w: [Dt, C]; idx: [N, K] int32; table: [VPAD, C]."""
    n, dt = int(tiles.shape[0]), int(tiles.shape[1])
    c = int(w.shape[1])
    vpad = int(table.shape[0])
    k = int(idx.shape[1])
    nblk, bn = _split_rows(n)
    return pl.pallas_call(
        _tile_embed_kernel,
        out_shape=jax.ShapeDtypeStruct((n, c), jnp.float32),
        grid=(nblk,),
        in_specs=[
            pl.BlockSpec((bn, k), lambda i: (i, 0)),
            pl.BlockSpec((bn, dt), lambda i: (i, 0)),
            pl.BlockSpec((dt, c), lambda i: (0, 0)),     # W resident / constant
            pl.BlockSpec((vpad, c), lambda i: (0, 0)),   # table resident
        ],
        out_specs=pl.BlockSpec((bn, c), lambda i: (i, 0)),
        compiler_params=pltpu.CompilerParams(dimension_semantics=("parallel",)),
    )(idx, tiles, w, table)


# ---------------------------------------------------------------------------
# Parameter initialization (deterministic, synthetic), mirroring
# AutoEmbedding.__init__ with share_temporal_embedding=True.
# ---------------------------------------------------------------------------
def init_params(key, *, channels, max_time, mode_n, cursor_nvec, tile_dim,
                n_tile_pos, readout_total):
    def tbl(k, v):
        return jax.random.normal(k, (v, channels), jnp.float32) * 0.02

    keys = jax.random.split(key, 8)
    return {
        "temporal": tbl(keys[0], max_time),          # shared TemporalEmbedding
        "mode": tbl(keys[1], mode_n),                # DiscreteTemporalEmbedding
        "cursor": [tbl(keys[2], cursor_nvec[0]),     # MultiDiscreteTemporalEmbedding
                   tbl(keys[3], cursor_nvec[1])],
        "workspace_w": jax.random.normal(keys[4], (tile_dim, channels), jnp.float32) * 0.02,
        "workspace_b": jnp.zeros((channels,), jnp.float32),
        "workspace_pos": tbl(keys[5], n_tile_pos),
        "readout": tbl(keys[6], readout_total),      # readout DiscreteTemporalEmbedding
    }


def build_embed_table(params, vpad=VPAD):
    """Concatenate all small vocab tables (+ zero row + bias row) into one."""
    C = int(params["temporal"].shape[1])
    rows = [("zero", jnp.zeros((1, C), jnp.float32)),
            ("temporal", params["temporal"]),
            ("mode", params["mode"])]
    for i, t in enumerate(params["cursor"]):
        rows.append(("cursor%d" % i, t))
    rows += [("readout", params["readout"]),
             ("pos", params["workspace_pos"]),
             ("bias", params["workspace_b"].reshape(1, C))]
    off, cur, mats = {}, 0, []
    for name, m in rows:
        off[name] = cur
        cur += int(m.shape[0])
        mats.append(m)
    assert cur <= vpad, "total vocabulary exceeds padded table size"
    table = jnp.concatenate(mats, axis=0)
    table = jnp.pad(table, ((0, vpad - cur), (0, 0)))
    return table, off


def _make_idx(columns, k_max):
    """Stack index columns into [N, k_max] int32, padding with 0 (zero row)."""
    cols = [c.reshape(-1).astype(jnp.int32) for c in columns]
    n = int(cols[0].shape[0])
    cols += [jnp.zeros((n,), jnp.int32)] * (k_max - len(cols))
    return jnp.stack(cols, axis=1)


# ---------------------------------------------------------------------------
# AutoEmbedding.forward(x, t, pad) -> (out_x, t, pad)
# (the original returns the *input* t/pad dicts; replicated here)
# ---------------------------------------------------------------------------
def auto_embedding_forward(params, x, t, pad):
    C = int(params["temporal"].shape[1])
    table, off = build_embed_table(params)

    s, b = x["mode"]["x"].shape
    sc, bc, kc = x["cursor"]["x"].shape
    rs, rb = x["readout"]["x"].shape
    k_tok = max(2, kc + 1)

    # 'mode'    : E_mode[x] + E_temporal[t]
    mode_idx = _make_idx(
        [off["mode"] + x["mode"]["x"].reshape(-1),
         off["temporal"] + t["mode"].reshape(-1)], k_tok)
    # 'cursor'  : sum_k E_k[x_k] + E_temporal[t]
    cursor_cols = [off["cursor%d" % i] + x["cursor"]["x"][..., i].reshape(-1)
                   for i in range(kc)]
    cursor_idx = _make_idx(
        cursor_cols + [off["temporal"] + t["cursor"].reshape(-1)], k_tok)
    # 'readout' : E_readout[x] + E_temporal[t]
    readout_idx = _make_idx(
        [off["readout"] + x["readout"]["x"].reshape(-1),
         off["temporal"] + t["readout"].reshape(-1)], k_tok)

    # One pallas_call for all discrete token streams.
    tok_idx = jnp.concatenate([mode_idx, cursor_idx, readout_idx], axis=0)
    tok_out = multihot_embed(tok_idx, table)

    n_mode, n_cursor = s * b, sc * bc
    out_x = {
        "mode": tok_out[:n_mode].reshape(s, b, C),
        "cursor": tok_out[n_mode:n_mode + n_cursor].reshape(sc, bc, C),
        "readout": tok_out[n_mode + n_cursor:].reshape(rs, rb, C),
    }

    # 'workspace' : linear(tile pixels) + E_pos[pos] + E_temporal[t] + bias,
    # fully fused into one pallas_call (bias is a table row in every index list).
    n_tiles = int(x["workspace"]["x"].shape[0])
    ws_idx = _make_idx(
        [off["pos"] + x["workspace"]["pos"],
         off["temporal"] + t["workspace"],
         jnp.full((n_tiles,), off["bias"], jnp.int32)], 3)
    out_x["workspace"] = tile_embed(
        x["workspace"]["x"], params["workspace_w"], ws_idx, table)

    # TODO(synk): embedding dropout applied as eval-mode identity (train-mode
    # RNG is not reproducible across frameworks).
    return out_x, t, pad


if __name__ == "__main__":
    S, B, C = 8, 2, 128
    MAX_T = 16
    MODE_N = 12
    CURSOR_NVEC = (5, 7)
    IMG, TILE = 16, 8
    TILES_PER_FRAME = (IMG // TILE) ** 2          # 4 tiles per frame
    TILE_DIM = TILE * TILE * 3                    # 192 (HWC-flattened tile)
    READOUT_TOTAL = 3                             # readout_layout.total (0 = PAD)
    N_READOUTS = 2                                # non-PAD readout heads

    key = jax.random.PRNGKey(0)
    kp, kx = jax.random.split(key)
    params = init_params(kp, channels=C, max_time=MAX_T, mode_n=MODE_N,
                         cursor_nvec=CURSOR_NVEC, tile_dim=TILE_DIM,
                         n_tile_pos=TILES_PER_FRAME, readout_total=READOUT_TOTAL)

    ks = jax.random.split(kx, 4)
    time_step = jnp.broadcast_to(jnp.arange(S, dtype=jnp.int32)[:, None], (S, B))
    x_mode = jax.random.randint(ks[0], (S, B), 0, MODE_N, jnp.int32)
    x_cursor = jnp.stack(
        [jax.random.randint(ks[1], (S, B), 0, CURSOR_NVEC[0], jnp.int32),
         jax.random.randint(ks[2], (S, B), 0, CURSOR_NVEC[1], jnp.int32)], axis=-1)

    # workspace tile tokens: every frame contributes TILES_PER_FRAME tiles.
    n_tile_tokens = S * B * TILES_PER_FRAME
    tile_pixels = jax.random.uniform(ks[3], (n_tile_tokens, TILE_DIM), jnp.float32)
    tile_pos = jnp.tile(jnp.arange(TILES_PER_FRAME, dtype=jnp.int32), S * B)
    tile_t = jnp.repeat(time_step.reshape(-1), TILES_PER_FRAME)

    # readout tokens: one token per non-PAD readout head per frame.
    readout_x = jnp.concatenate(
        [jnp.full((S, B), 1 + r, jnp.int32) for r in range(N_READOUTS)], axis=0)
    readout_t = jnp.concatenate([time_step] * N_READOUTS, axis=0)

    x = {
        "mode": {"x": x_mode},
        "cursor": {"x": x_cursor},
        "workspace": {"x": tile_pixels, "pos": tile_pos},
        "readout": {"x": readout_x},
    }
    t = {"mode": time_step, "cursor": time_step, "workspace": tile_t,
         "readout": readout_t}
    pad = {"mode": jnp.full((B,), S, jnp.int32),
           "cursor": jnp.full((B,), S, jnp.int32),
           "workspace": jnp.full((B,), S * TILES_PER_FRAME, jnp.int32),
           "readout": jnp.full((B,), S * N_READOUTS, jnp.int32)}

    out_x, out_t, out_pad = auto_embedding_forward(params, x, t, pad)
    jax.block_until_ready(out_x)

    # sanity check against a plain-JAX reference (tolerances account for MXU
    # matmul rounding in the one-hot gather / projection paths)
    ref_mode = params["mode"][x_mode] + params["temporal"][time_step]
    assert jnp.allclose(out_x["mode"], ref_mode, atol=1e-3)
    ref_cursor = (params["cursor"][0][x_cursor[..., 0]]
                  + params["cursor"][1][x_cursor[..., 1]]
                  + params["temporal"][time_step])
    assert jnp.allclose(out_x["cursor"], ref_cursor, atol=1e-3)
    ref_ws = (tile_pixels @ params["workspace_w"] + params["workspace_b"]
              + params["workspace_pos"][tile_pos] + params["temporal"][tile_t])
    assert jnp.allclose(out_x["workspace"], ref_ws, atol=2e-3)
    ref_ro = params["readout"][readout_x] + params["temporal"][readout_t]
    assert jnp.allclose(out_x["readout"], ref_ro, atol=1e-3)

    print("KERNEL_OK")
</pallas_src>

<mosaic_0001>
module attributes {stable_mosaic.version = 11 : i64} {
  func.func @_multihot_embed_kernel(%arg0: i32, %arg1: memref<32x3xi32, #tpu.memory_space<vmem>>, %arg2: memref<128x128xf32, #tpu.memory_space<vmem>>, %arg3: memref<32x128xf32, #tpu.memory_space<vmem>>) attributes {dimension_semantics = [#tpu.dimension_semantics<parallel>], iteration_bounds = array<i64: 2>, scalar_prefetch = 0 : i64, scratch_operands = 0 : i64, tpu.core_type = #tpu.core_type<tc>, window_params = [{transform_indices = @transform_0, window_bounds = array<i64: 32, 3>}, {pipeline_mode = #tpu.pipeline_mode<synchronous>, transform_indices = @transform_1, window_bounds = array<i64: 128, 128>}, {transform_indices = @transform_2, window_bounds = array<i64: 32, 128>}]} {
    %0 = tpu.iota {dimensions = array<i32: 1>} : vector<32x128xi32>
    %cst = arith.constant 0.000000e+00 : f32
    %1 = vector.broadcast %cst : f32 to vector<32x128xf32>
    %c0 = arith.constant 0 : index
    %c0_0 = arith.constant 0 : index
    %2 = vector.load %arg1[%c0, %c0_0] : memref<32x3xi32, #tpu.memory_space<vmem>>, vector<32x1xi32>
    %3 = vector.broadcast %2 : vector<32x1xi32> to vector<32x128xi32>
    %4 = arith.cmpi eq, %3, %0 : vector<32x128xi32>
    %5 = arith.extui %4 : vector<32x128xi1> to vector<32x128xi32>
    %6 = arith.sitofp %5 : vector<32x128xi32> to vector<32x128xf32>
    %7 = arith.addf %1, %6 : vector<32x128xf32>
    %c0_1 = arith.constant 0 : index
    %c1 = arith.constant 1 : index
    %8 = vector.load %arg1[%c0_1, %c1] : memref<32x3xi32, #tpu.memory_space<vmem>>, vector<32x1xi32>
    %9 = vector.broadcast %8 : vector<32x1xi32> to vector<32x128xi32>
    %10 = arith.cmpi eq, %9, %0 : vector<32x128xi32>
    %11 = arith.extui %10 : vector<32x128xi1> to vector<32x128xi32>
    %12 = arith.sitofp %11 : vector<32x128xi32> to vector<32x128xf32>
    %13 = arith.addf %7, %12 : vector<32x128xf32>
    %c0_2 = arith.constant 0 : index
    %c2 = arith.constant 2 : index
    %14 = vector.load %arg1[%c0_2, %c2] : memref<32x3xi32, #tpu.memory_space<vmem>>, vector<32x1xi32>
    %15 = vector.broadcast %14 : vector<32x1xi32> to vector<32x128xi32>
    %16 = arith.cmpi eq, %15, %0 : vector<32x128xi32>
    %17 = arith.extui %16 : vector<32x128xi1> to vector<32x128xi32>
    %18 = arith.sitofp %17 : vector<32x128xi32> to vector<32x128xf32>
    %19 = arith.addf %13, %18 : vector<32x128xf32>
    %c0_3 = arith.constant 0 : index
    %c0_4 = arith.constant 0 : index
    %20 = vector.load %arg2[%c0_3, %c0_4] : memref<128x128xf32, #tpu.memory_space<vmem>>, vector<128x128xf32>
    %cst_5 = arith.constant dense<0.000000e+00> : vector<32x128xf32>
    %21 = tpu.matmul %19, %20, %cst_5 {dimension_numbers = #tpu.dot_dimension_numbers<[1], [0], [0], [1], [0, 0, 1, 1], [], []>} : vector<32x128xf32>, vector<128x128xf32>, vector<32x128xf32> -> vector<32x128xf32>
    %c0_6 = arith.constant 0 : index
    %c0_7 = arith.constant 0 : index
    %22 = vector.load %arg3[%c0_6, %c0_7] : memref<32x128xf32, #tpu.memory_space<vmem>>, vector<32x128xf32>
    tpu.vector_store %arg3[%c0_6, %c0_7], %21 {strides = array<i32>} : memref<32x128xf32, #tpu.memory_space<vmem>>, vector<32x128xf32>,
    return
  }
  func.func @transform_0(%arg0: i32) -> (i32, i32) {
    %c0_i32 = arith.constant 0 : i32
    %c0_i32_0 = arith.constant 0 : i32
    return %arg0, %c0_i32 : i32, i32
  }
  func.func @transform_1(%arg0: i32) -> (i32, i32) {
    %c0_i32 = arith.constant 0 : i32
    %c0_i32_0 = arith.constant 0 : i32
    %c0_i32_1 = arith.constant 0 : i32
    return %c0_i32, %c0_i32_0 : i32, i32
  }
  func.func @transform_2(%arg0: i32) -> (i32, i32) {
    %c0_i32 = arith.constant 0 : i32
    %c0_i32_0 = arith.constant 0 : i32
    return %arg0, %c0_i32 : i32, i32
  }
}

</mosaic_0001>

<llo_original>
// kernel: tpu_custom_call.1
$region0: #{tpu_custom_call.1}
  #allocation0 [shape = 'u32[]', space=smem, size = 0x4, offset = 0x4, fixed_abs, tag = 'smem constant byte address 0x4 - core index']
  #allocation1 [shape = 'u32[144,128]{1,0:T(1,128)}', space=vmem, size = 0x12000, scoped, tag = 'internal scratch']
  %s0 = inlined_call_operand.vmem [shape: s32[64,3], index: 0, kind: input, shape index: {}]
  %s1 = inlined_call_operand.hbm [shape: f32[128,128], index: 1, kind: input, shape index: {}]
  %s2 = inlined_call_operand.hbm [shape: f32[64,128], index: 2, kind: output, shape index: {}]
  %s3 = sld [smem:[#allocation0]]
  $region45: #{tpu_custom_call.1} parent=0
    _
  %s5 = ssub.s32 1, %s3
  %s6 = scalar_select 0, %s5, %s3
  $region1: #{tpu_custom_call.1} parent=0
    #allocation2 [shape = 'u8[65536]{0}', space=vmem, size = 0x10000, scoped, tag = 'input window, operand 1, single buffered']
    #allocation3 [shape = 's32[2]{0}', space=sflag, size = 0x8, scoped, tag = 'scoped memory for tpu_custom_call.1']
    #allocation4 [shape = 's32[2]{0}', space=sflag, size = 0x8, scoped, tag = 'scoped memory for tpu_custom_call.1']
    #allocation5 [shape = 'u8[32768]{0}', space=vmem, size = 0x8000, scoped, tag = 'output window, operand 0']
    %7 = vsyncpa [#allocation3], 0
    %8 = vsyncpa [#allocation4], 0
    %s9 = scalar_lea.sflag [#allocation4], 1
    %10 = vsyncpa %s9, 0
    loop: start=0, step=1, limit=4
    $region2: #{tpu_custom_call.1} parent=1 // loop_pre_header
      _
    $region3: #{tpu_custom_call.1} parent=1 // loop_header
      %s12 = sphi 0, %s16
      %p13 = scmp.ge.s32.totalorder %s12, 4
      %s22 = sphi 0, %s24
      %s25 = sphi 0, %s22
      %s26 = sphi 0, %s25
      %s42 = sphi 0, %s26
      %s46 = sphi 0, %s46
      %s48 = sphi 0, %s46
      %s49 = sphi 0, %s48
      %s63 = sphi 0, %s49
      %s69 = sphi 0, %s71
      %s72 = sphi 0, %s69
      %s73 = sphi 0, %s72
      %s89 = sphi 0, %s73
    $region4: #{tpu_custom_call.1} parent=1 // loop_header_branch
      %15 = sbr.rel (%p13) target = $region8
    $region5: #{tpu_custom_call.1} parent=1 // loop_body
      %s17 = ssub.s32 %s12, 1
      %s18 = ssub.s32 %s12, 2
      %s19 = sadd.s32 %s12, 1
      %s20 = ssub.s32 %s12, %s19
      %p21 = scmp.eq.s32.totalorder %s20, 0
      %s23 = sadd.s32 %s22, 1
      %s24 = scalar_select %p21, %s22, %s23
      %p27 = pneg %p21
      %p28 = scmp.eq.s32.totalorder %s12, 1
      %p29 = por %p27, %p28
      %p30 = scmp.ne.s32.totalorder %s22, %s25
      %p31 = scmp.eq.s32.totalorder %s12, 0
      %p32 = por %p30, %p31
      %p33 = scmp.ne.s32.totalorder %s22, %s25
      %p34 = scmp.eq.s32.totalorder %s17, 1
      %p35 = por %p33, %p34
      %p36 = scmp.ne.s32.totalorder %s25, %s26
      %p37 = scmp.eq.s32.totalorder %s17, 0
      %p38 = por %p36, %p37
      %p39 = scmp.ne.s32.totalorder %s25, %s26
      %p40 = scmp.eq.s32.totalorder %s18, 1
      %p41 = por %p39, %p40
      %p43 = scmp.ne.s32.totalorder %s26, %s42
      %p44 = scmp.eq.s32.totalorder %s18, 0
      %p45 = por %p43, %p44
      %s47 = sadd.s32 %s46, 1
      %p50 = scmp.eq.s32.totalorder %s12, 1
      %p51 = scmp.ne.s32.totalorder %s46, %s48
      %p52 = scmp.eq.s32.totalorder %s12, 0
      %p53 = por %p51, %p52
      %p54 = scmp.ne.s32.totalorder %s46, %s48
      %p55 = scmp.eq.s32.totalorder %s17, 1
      %p56 = por %p54, %p55
      %p57 = scmp.ne.s32.totalorder %s48, %s49
      %p58 = scmp.eq.s32.totalorder %s17, 0
      %p59 = por %p57, %p58
      %p60 = scmp.ne.s32.totalorder %s48, %s49
      %p61 = scmp.eq.s32.totalorder %s18, 1
      %p62 = por %p60, %p61
      %p64 = scmp.ne.s32.totalorder %s49, %s63
      %p65 = scmp.eq.s32.totalorder %s18, 0
      %p66 = por %p64, %p65
      %s67 = ssub.s32 %s12, %s19
      %p68 = scmp.eq.s32.totalorder %s67, 0
      %s70 = sadd.s32 %s69, 1
      %s71 = scalar_select %p68, %s69, %s70
      %p74 = pneg %p68
      %p75 = scmp.eq.s32.totalorder %s12, 1
      %p76 = por %p74, %p75
      %p77 = scmp.ne.s32.totalorder %s69, %s72
      %p78 = scmp.eq.s32.totalorder %s12, 0
      %p79 = por %p77, %p78
      %p80 = scmp.ne.s32.totalorder %s69, %s72
      %p81 = scmp.eq.s32.totalorder %s17, 1
      %p82 = por %p80, %p81
      %p83 = scmp.ne.s32.totalorder %s72, %s73
      %p84 = scmp.eq.s32.totalorder %s17, 0
      %p85 = por %p83, %p84
      %p86 = scmp.ne.s32.totalorder %s72, %s73
      %p87 = scmp.eq.s32.totalorder %s18, 1
      %p88 = por %p86, %p87
      %p90 = scmp.ne.s32.totalorder %s73, %s89
      %p91 = scmp.eq.s32.totalorder %s18, 0
      %p92 = por %p90, %p91
      %p93 = scmp.le.s32.totalorder 1, %s12
      %p94 = scmp.lt.s32.totalorder %s12, 3
      %p95 = pnand %p93, %p94
      %p96 = pneg %p95
      // Predicated region
      $region9: #{tpu_custom_call.1} parent=5 // pred_check
        _
      $region10: #{tpu_custom_call.1} parent=5 // pred_check_branch
        %98 = sbr.rel (%p95) target = $region12
      $region11: #{tpu_custom_call.1} parent=5 // pred_region
        %s99 = ssub.s32 %s12, 1
        // Predicated region
        $region13: #{tpu_custom_call.1} parent=11 // pred_check
          %p100 = pneg %p59
        $region14: #{tpu_custom_call.1} parent=11 // pred_check_branch
          %102 = sbr.rel (%p100) target = $region16
        $region15: #{tpu_custom_call.1} parent=11 // pred_region
          %s104 = ssub.s32 2048, 2048
          %105 = vsyncadd [#allocation3], %s104
          %s106 = sshll.u32 [#allocation2], 4
          %s107 = int_to_ptr.vmem [resolvable:$true] %s106
          %112 = dma.hbm_to_vmem [thread:$0]  %s1, 2048, %s107, [#allocation3], 128, 128, 8
        $region16: #{tpu_custom_call.1} parent=11 // pred_fallthru
          _
      $region12: #{tpu_custom_call.1} parent=5 // pred_fallthru
        _
      %p113 = scmp.lt.s32.totalorder %s12, 2
      // Predicated region
      $region17: #{tpu_custom_call.1} parent=5 // pred_check
        %p114 = pneg %p113
      $region18: #{tpu_custom_call.1} parent=5 // pred_check_branch
        %116 = sbr.rel (%p114) target = $region20
      $region19: #{tpu_custom_call.1} parent=5 // pred_region
        // Predicated region
        $region21: #{tpu_custom_call.1} parent=19 // pred_check
          %p117 = pneg %p32
        $region22: #{tpu_custom_call.1} parent=19 // pred_check_branch
          %119 = sbr.rel (%p117) target = $region24
        $region23: #{tpu_custom_call.1} parent=19 // pred_region
          %s120 = smul.u32 4, %s12
          %p121 = scmp.lt.s32.totalorder %s120, 7
          %s122 = scalar_select %p121, %s120, 7
          %s123 = smul.addr %s122, 8
          %s124 = scalar_lea.vmem %s0, %s123
          %s125 = smul.u32 4, %s12
        $region24: #{tpu_custom_call.1} parent=19 // pred_fallthru
          _
      $region20: #{tpu_custom_call.1} parent=5 // pred_fallthru
        _
      %p126 = scmp.le.s32.totalorder 1, %s12
      %p127 = scmp.lt.s32.totalorder %s12, 3
      %p128 = pnand %p126, %p127
      %p129 = pneg %p128
      // Predicated region
      $region25: #{tpu_custom_call.1} parent=5 // pred_check
        _
      $region26: #{tpu_custom_call.1} parent=5 // pred_check_branch
        %131 = sbr.rel (%p128) target = $region28
      $region27: #{tpu_custom_call.1} parent=5 // pred_region
        %s132 = ssub.s32 %s12, 1
        // Predicated region
        $region29: #{tpu_custom_call.1} parent=27 // pred_check
          %p133 = pneg %p59
        $region30: #{tpu_custom_call.1} parent=27 // pred_check_branch
          %135 = sbr.rel (%p133) target = $region32
        $region31: #{tpu_custom_call.1} parent=27 // pred_region
          %136 = dma.done [#allocation3], 2048
        $region32: #{tpu_custom_call.1} parent=27 // pred_fallthru
          _
        %s137 = smul.u32 4, %s17
        %p138 = scmp.lt.s32.totalorder %s137, 7
        %s139 = scalar_select %p138, %s137, 7
        %s140 = smul.addr %s139, 8
        %s141 = scalar_lea.vmem %s0, %s140
        %p142 = pneg %p38
        %p143 = pneg %p35
        %p144 = pneg %p59
        %p145 = pneg %p56
        %p146 = pneg %p85
        %p147 = pneg %p82
        %s148 = sand.u32 %s72, 1
        %s149 = scalar_lea.sflag [#allocation4], %s148
        %s150 = sand.u32 %s72, 1
        %s151 = smul.addr %s150, 32
        %s152 = scalar_lea.vmem [#allocation5], %s151
        %s153 = smul.u32 4, %s17
        %p154 = scmp.lt.s32.totalorder %s153, 7
        %s155 = scalar_select %p154, %s153, 7
        %s156 = smul.addr %s155, 8
        %s157 = scalar_lea.vmem %s0, %s156
        %s158 = smul.u32 4, %s17
        %s159 = smul.u32 4, %s17
        %v160 = vlaneseq
        %v161 = vand.u32 %v160, 127
        %v162 = vld [vmem:[%s157] sm:$0xff]
        %v163 = vld [vmem:[%s157 + $0x8] sm:$0xff]
        %v164 = vld [vmem:[%s157 + $0x10] sm:$0xff]
        %v165 = vld [vmem:[%s157 + $0x18] sm:$0xff]
        %166 = vset.pattern.permute.xlu0 0
        %167 = vperm.xlu0 %166, %v162
        %v168 = vpop.permute.xlu0 %167
        %169 = vset.pattern.permute.xlu0 0
        %170 = vperm.xlu0 %169, %v163
        %v171 = vpop.permute.xlu0 %170
        %172 = vset.pattern.permute.xlu0 0
        %173 = vperm.xlu0 %172, %v164
        %v174 = vpop.permute.xlu0 %173
        %175 = vset.pattern.permute.xlu0 0
        %176 = vperm.xlu0 %175, %v165
        %v177 = vpop.permute.xlu0 %176
        %vm178 = vcmp.eq.s32.totalorder %v168, %v161
        %vm179 = vcmp.eq.s32.totalorder %v171, %v161
        %vm180 = vcmp.eq.s32.totalorder %v174, %v161
        %vm181 = vcmp.eq.s32.totalorder %v177, %v161
        %v182 = vsel %vm178, 1, 0
        %v183 = vsel %vm179, 1, 0
        %v184 = vsel %vm180, 1, 0
        %v185 = vsel %vm181, 1, 0
        %v186 = vcvt.s32.f32 %v182
        %v187 = vcvt.s32.f32 %v183
        %v188 = vcvt.s32.f32 %v184
        %v189 = vcvt.s32.f32 %v185
        %v190 = vadd.f32 %v186, 0.0
        %v191 = vadd.f32 %v187, 0.0
        %v192 = vadd.f32 %v188, 0.0
        %v193 = vadd.f32 %v189, 0.0
        %194 = vset.pattern.permute.xlu0 1
        %195 = vperm.xlu0 %194, %v162
        %v196 = vpop.permute.xlu0 %195
        %197 = vset.pattern.permute.xlu0 1
        %198 = vperm.xlu0 %197, %v163
        %v199 = vpop.permute.xlu0 %198
        %200 = vset.pattern.permute.xlu0 1
        %201 = vperm.xlu0 %200, %v164
        %v202 = vpop.permute.xlu0 %201
        %203 = vset.pattern.permute.xlu0 1
        %204 = vperm.xlu0 %203, %v165
        %v205 = vpop.permute.xlu0 %204
        %vm206 = vcmp.eq.s32.totalorder %v196, %v161
        %vm207 = vcmp.eq.s32.totalorder %v199, %v161
        %vm208 = vcmp.eq.s32.totalorder %v202, %v161
        %vm209 = vcmp.eq.s32.totalorder %v205, %v161
        %v210 = vsel %vm206, 1, 0
        %v211 = vsel %vm207, 1, 0
        %v212 = vsel %vm208, 1, 0
        %v213 = vsel %vm209, 1, 0
        %v214 = vcvt.s32.f32 %v210
        %v215 = vcvt.s32.f32 %v211
        %v216 = vcvt.s32.f32 %v212
        %v217 = vcvt.s32.f32 %v213
        %v218 = vadd.f32 %v190, %v214
        %v219 = vadd.f32 %v191, %v215
        %v220 = vadd.f32 %v192, %v216
        %v221 = vadd.f32 %v193, %v217
        %222 = vset.pattern.permute.xlu0 2
        %223 = vperm.xlu0 %222, %v162
        %v224 = vpop.permute.xlu0 %223
        %225 = vset.pattern.permute.xlu0 2
        %226 = vperm.xlu0 %225, %v163
        %v227 = vpop.permute.xlu0 %226
        %228 = vset.pattern.permute.xlu0 2
        %229 = vperm.xlu0 %228, %v164
        %v230 = vpop.permute.xlu0 %229
        %231 = vset.pattern.permute.xlu0 2
        %232 = vperm.xlu0 %231, %v165
        %v233 = vpop.permute.xlu0 %232
        %vm234 = vcmp.eq.s32.totalorder %v224, %v161
        %vm235 = vcmp.eq.s32.totalorder %v227, %v161
        %vm236 = vcmp.eq.s32.totalorder %v230, %v161
        %vm237 = vcmp.eq.s32.totalorder %v233, %v161
        %v238 = vsel %vm234, 1, 0
        %v239 = vsel %vm235, 1, 0
        %v240 = vsel %vm236, 1, 0
        %v241 = vsel %vm237, 1, 0
        %v242 = vcvt.s32.f32 %v238
        %v243 = vcvt.s32.f32 %v239
        %v244 = vcvt.s32.f32 %v240
        %v245 = vcvt.s32.f32 %v241
        %v246 = vadd.f32 %v218, %v242
        %v247 = vadd.f32 %v219, %v243
        %v248 = vadd.f32 %v220, %v244
        %v249 = vadd.f32 %v221, %v245
        %v250 = vld [vmem:[#allocation2] sm:$0xff]
        %v251 = vld [vmem:[#allocation2 + $0x8] sm:$0xff]
        %v252 = vld [vmem:[#allocation2 + $0x10] sm:$0xff]
        %v253 = vld [vmem:[#allocation2 + $0x18] sm:$0xff]
        %v254 = vld [vmem:[#allocation2 + $0x20] sm:$0xff]
        %v255 = vld [vmem:[#allocation2 + $0x28] sm:$0xff]
        %v256 = vld [vmem:[#allocation2 + $0x30] sm:$0xff]
        %v257 = vld [vmem:[#allocation2 + $0x38] sm:$0xff]
        %v258 = vld [vmem:[#allocation2 + $0x40] sm:$0xff]
        %v259 = vld [vmem:[#allocation2 + $0x48] sm:$0xff]
        %v260 = vld [vmem:[#allocation2 + $0x50] sm:$0xff]
        %v261 = vld [vmem:[#allocation2 + $0x58] sm:$0xff]
        %v262 = vld [vmem:[#allocation2 + $0x60] sm:$0xff]
        %v263 = vld [vmem:[#allocation2 + $0x68] sm:$0xff]
        %v264 = vld [vmem:[#allocation2 + $0x70] sm:$0xff]
        %v265 = vld [vmem:[#allocation2 + $0x78] sm:$0xff]
        %266 = vmatprep.subr.mxu0 0.0
        %267 = vmatpush1.msra.mxu0 %v265
        %268 = vmatprep.subr.mxu0 0.0
        %269 = vmatpush1.msra.mxu0 %v264
        %270 = vmatprep.subr.mxu0 0.0
        %271 = vmatpush1.msra.mxu0 %v263
        %272 = vmatprep.subr.mxu0 0.0
        %273 = vmatpush1.msra.mxu0 %v262
        %274 = vmatprep.subr.mxu0 0.0
        %275 = vmatpush1.msra.mxu0 %v261
        %276 = vmatprep.subr.mxu0 0.0
        %277 = vmatpush1.msra.mxu0 %v260
        %278 = vmatprep.subr.mxu0 0.0
        %279 = vmatpush1.msra.mxu0 %v259
        %280 = vmatprep.subr.mxu0 0.0
        %281 = vmatpush1.msra.mxu0 %v258
        %282 = vmatprep.subr.mxu0 0.0
        %283 = vmatpush1.msra.mxu0 %v257
        %284 = vmatprep.subr.mxu0 0.0
        %285 = vmatpush1.msra.mxu0 %v256
        %286 = vmatprep.subr.mxu0 0.0
        %287 = vmatpush1.msra.mxu0 %v255
        %288 = vmatprep.subr.mxu0 0.0
        %289 = vmatpush1.msra.mxu0 %v254
        %290 = vmatprep.subr.mxu0 0.0
        %291 = vmatpush1.msra.mxu0 %v253
        %292 = vmatprep.subr.mxu0 0.0
        %293 = vmatpush1.msra.mxu0 %v252
        %294 = vmatprep.subr.mxu0 0.0
        %295 = vmatpush1.msra.mxu0 %v251
        %296 = vmatprep.subr.mxu0 0.0
        %297 = vmatpush1.msra.mxu0 %v250
        %298 = vmatprep.subr.mxu0 0.0
        %299 = vmatpush2.msra.mxu0 0.0
        %300 = vmatprep.subr.mxu0 0.0
        %301 = vmatpush2.msra.mxu0 0.0
        %302 = vmatprep.subr.mxu0 0.0
        %303 = vmatpush2.msra.mxu0 0.0
        %304 = vmatprep.subr.mxu0 0.0
        %305 = vmatpush2.msra.mxu0 0.0
        %306 = vmatprep.subr.mxu0 0.0
        %307 = vmatpush2.msra.mxu0 0.0
        %308 = vmatprep.subr.mxu0 0.0
        %309 = vmatpush2.msra.mxu0 0.0
        %310 = vmatprep.subr.mxu0 0.0
        %311 = vmatpush2.msra.mxu0 0.0
        %312 = vmatprep.subr.mxu0 0.0
        %313 = vmatpush2.msra.mxu0 0.0
        %314 = vmatprep.subr.mxu0 0.0
        %315 = vmatpush2.msra.mxu0 0.0
        %316 = vmatprep.subr.mxu0 0.0
        %317 = vmatpush2.msra.mxu0 0.0
        %318 = vmatprep.subr.mxu0 0.0
        %319 = vmatpush2.msra.mxu0 0.0
        %320 = vmatprep.subr.mxu0 0.0
        %321 = vmatpush2.msra.mxu0 0.0
        %322 = vmatprep.subr.mxu0 0.0
        %323 = vmatpush2.msra.mxu0 0.0
        %324 = vmatprep.subr.mxu0 0.0
        %325 = vmatpush2.msra.mxu0 0.0
        %326 = vmatprep.subr.mxu0 0.0
        %327 = vmatpush2.msra.mxu0 0.0
        %328 = vmatprep.subr.mxu0 0.0
        %329 = vmatpush2.msra.mxu0 0.0
        %330 = vmatprep.mubr.f32.mxu0 0.0
        %331 = vmatmul.mubr.f32.gmra.mxu0 %v246
        %v332 = vpop.f32.mrf.mxu0
        %v333 = vadd.f32 0.0, %v332
        %v334 = vpop.f32.mrf.mxu0
        %335 = vmatprep.mubr.f32.mxu0 0.0
        %336 = vmatmul.mubr.f32.gmra.mxu0 %v247
        %v337 = vpop.f32.mrf.mxu0
        %v338 = vadd.f32 0.0, %v337
        %v339 = vpop.f32.mrf.mxu0
        %340 = vmatprep.mubr.f32.mxu0 0.0
        %341 = vmatmul.mubr.f32.gmra.mxu0 %v248
        %v342 = vpop.f32.mrf.mxu0
        %v343 = vadd.f32 0.0, %v342
        %v344 = vpop.f32.mrf.mxu0
        %345 = vmatprep.mubr.f32.mxu0 0.0
        %346 = vmatmul.mubr.f32.gmra.mxu0 %v249
        %v347 = vpop.f32.mrf.mxu0
        %v348 = vadd.f32 0.0, %v347
        %v349 = vpop.f32.mrf.mxu0
        %350 = vdwg.mxu0
        %351 = vst [vmem:[%s152] sm:$0xff] %v333
        %352 = vst [vmem:[%s152 + $0x8] sm:$0xff] %v338
        %353 = vst [vmem:[%s152 + $0x10] sm:$0xff] %v343
        %354 = vst [vmem:[%s152 + $0x18] sm:$0xff] %v348
        %s355 = sand.u32 %s72, 1
        %s356 = scalar_lea.sflag [#allocation4], %s355
        %s357 = sand.u32 %s72, 1
        %s358 = smul.addr %s357, 32
        %s359 = scalar_lea.vmem [#allocation5], %s358
        // Predicated region
        $region33: #{tpu_custom_call.1} parent=27 // pred_check
          %p360 = pneg %p82
        $region34: #{tpu_custom_call.1} parent=27 // pred_check_branch
          %362 = sbr.rel (%p360) target = $region36
        $region35: #{tpu_custom_call.1} parent=27 // pred_region
          %s363 = smul.u32 4, %s17
          %s365 = ssub.s32 512, 512
          %366 = vsyncadd %s356, %s365
          %s367 = smul.addr %s363, 128
          %s368 = scalar_lea.hbm %s2, %s367
          %s369 = sshll.u32 %s359, 4
          %s370 = int_to_ptr.vmem [resolvable:$true] %s369
          %375 = dma.vmem_to_hbm [thread:$0]  %s370, 512, %s368, %s356, 128, 128, 8
        $region36: #{tpu_custom_call.1} parent=27 // pred_fallthru
          _
      $region28: #{tpu_custom_call.1} parent=5 // pred_fallthru
        _
      %p376 = scmp.le.s32.totalorder 2, %s12
      // Predicated region
      $region37: #{tpu_custom_call.1} parent=5 // pred_check
        %p377 = pneg %p376
      $region38: #{tpu_custom_call.1} parent=5 // pred_check_branch
        %379 = sbr.rel (%p377) target = $region40
      $region39: #{tpu_custom_call.1} parent=5 // pred_region
        %s380 = ssub.s32 %s12, 2
        // Predicated region
        $region41: #{tpu_custom_call.1} parent=39 // pred_check
          %p381 = pneg %p88
        $region42: #{tpu_custom_call.1} parent=39 // pred_check_branch
          %383 = sbr.rel (%p381) target = $region44
        $region43: #{tpu_custom_call.1} parent=39 // pred_region
          %s384 = sand.u32 %s73, 1
          %s385 = scalar_lea.sflag [#allocation4], %s384
          %s386 = sand.u32 %s73, 1
          %s387 = smul.addr %s386, 32
          %s388 = scalar_lea.vmem [#allocation5], %s387
          %389 = dma.done %s385, 512
        $region44: #{tpu_custom_call.1} parent=39 // pred_fallthru
          _
      $region40: #{tpu_custom_call.1} parent=5 // pred_fallthru
        _
    $region6: #{tpu_custom_call.1} parent=1 // loop_footer
      %s16 = sadd.s32 1, %s12
    $region7: #{tpu_custom_call.1} parent=1 // loop_footer_branch
      %11 = sbr.rel target = $region3
    $region8: #{tpu_custom_call.1} parent=1 // loop_exit
      _
    %390 = vsyncpa [#allocation3], 1
    %s391 = scalar_lea.sflag [#allocation3], 1
    %392 = vsyncpa %s391, 1
    %393 = vsyncpa [#allocation4], 1
    %s394 = scalar_lea.sflag [#allocation4], 1
    %395 = vsyncpa %s394, 1

</llo_original>
